<compile_context>
chip_gen: v5e
topology: v5e:2x2
jax: 0.10.0
libtpu: 0.0.40
codegen_flags: <defaults>
</compile_context>

<pallas_src>
import functools

import jax
import jax.numpy as jnp
from jax.experimental import pallas as pl
from jax.experimental.pallas import tpu as pltpu

_LN_EPS = 1e-5


def _silu(v):
    return v * jax.nn.sigmoid(v)


def _residual_block_kernel(
    x_ref,       # [TILE_B, IN_F]        streamed
    et_ref,      # [TILE_B, T_F]         streamed
    el_ref,      # [TILE_B, L_F]         streamed
    w_fc_ref,    # [IN_F, OUT_PAD]       resident
    w_t_ref,     # [T_F,  OUT_PAD]       resident
    w_l_ref,     # [L_F,  OUT_PAD]       resident
    b_ref,       # [3, OUT_PAD]          resident: rows = (b_fc, b_t, b_l), zero-padded
    gamma_ref,   # [1, OUT_PAD]          resident, zero-padded
    beta_ref,    # [1, OUT_PAD]          resident, zero-padded
    o_ref,       # [TILE_B, OUT_PAD]
    *,
    out_features,
    matmul_dtype,
):
    out_pad = o_ref.shape[-1]
    f32 = jnp.float32

    x = x_ref[...].astype(f32)
    et = _silu(et_ref[...].astype(f32))   # SiLU -> Linear (emb_time_layer)
    el = _silu(el_ref[...].astype(f32))   # SiLU -> Linear (emb_label_layer)

    def mm(a, w_ref):
        w = w_ref[...]
        if matmul_dtype is not None:
            a = a.astype(matmul_dtype)
            w = w.astype(matmul_dtype)
        return jnp.dot(a, w, preferred_element_type=f32)

    b = b_ref[...].astype(f32)
    h = mm(x, w_fc_ref) + b[0:1, :]       # fc(x)
    t = mm(et, w_t_ref) + b[1:2, :]       # emb_time_layer(emb_time)
    l = mm(el, w_l_ref) + b[2:3, :]       # emb_label_layer(emb_label)

    h = h * l + t                         # padded lanes: 0*0 + 0 = 0 exactly

    # LayerNorm over the REAL out_features lanes (biased variance, eps inside rsqrt).
    if out_pad == out_features:
        mean = jnp.mean(h, axis=-1, keepdims=True)
        cent = h - mean
        var = jnp.mean(cent * cent, axis=-1, keepdims=True)
    else:
        inv_n = jnp.float32(1.0 / out_features)
        mean = jnp.sum(h, axis=-1, keepdims=True) * inv_n     # pad lanes are exactly 0
        lane = jax.lax.broadcasted_iota(jnp.int32, h.shape, dimension=1)
        cent = jnp.where(lane < out_features, h - mean, 0.0)  # mask pads for variance
        var = jnp.sum(cent * cent, axis=-1, keepdims=True) * inv_n

    hn = cent * jax.lax.rsqrt(var + _LN_EPS)
    hn = hn * gamma_ref[...].astype(f32) + beta_ref[...].astype(f32)  # pads stay 0

    # SiLU activation; Dropout(p=0) is identity. silu(0)=0 keeps pad lanes zero.
    o_ref[...] = _silu(hn).astype(o_ref.dtype)


def _pad_params(params, out_pad):
    """Zero-pad every parameter along the output-feature axis to OUT_PAD and
    pack the three biases as rows of a single [3, OUT_PAD] array."""
    w_fc, w_t, w_l = params["w_fc"], params["w_t"], params["w_l"]
    out_f = w_fc.shape[1]
    dtype = w_fc.dtype
    pad = out_pad - out_f

    def pad_w(w):
        return jnp.pad(w, ((0, 0), (0, pad))) if pad else w

    b_pack = jnp.zeros((3, out_pad), dtype)
    b_pack = b_pack.at[0, :out_f].set(params["b_fc"])
    b_pack = b_pack.at[1, :out_f].set(params["b_t"])
    b_pack = b_pack.at[2, :out_f].set(params["b_l"])

    gamma = jnp.zeros((1, out_pad), dtype).at[:, :out_f].set(params["gamma"].reshape(1, out_f))
    beta = jnp.zeros((1, out_pad), dtype).at[:, :out_f].set(params["beta"].reshape(1, out_f))
    return pad_w(w_fc), pad_w(w_t), pad_w(w_l), b_pack, gamma, beta


def residual_block(x, emb_time, emb_label, params, *, tile_b=512, matmul_dtype=None):
    """Batch-tiled, lane-dense ResidualBlock forward (weights stay VMEM-resident)."""
    B, in_f = x.shape
    t_f = emb_time.shape[1]
    l_f = emb_label.shape[1]
    out_f = params["w_fc"].shape[1]
    out_pad = pl.cdiv(out_f, 128) * 128

    # Clamp the batch tile to the (8-sublane aligned) batch size.
    tile_b = max(8, min((tile_b // 8) * 8, pl.cdiv(B, 8) * 8))
    b_pad = pl.cdiv(B, tile_b) * tile_b

    w_fc, w_t, w_l, b_pack, gamma, beta = _pad_params(params, out_pad)

    # Pad the batch only if the tile does not divide it (rows are independent,
    # zero rows are harmless and sliced away below).
    if b_pad != B:
        pad = ((0, b_pad - B), (0, 0))
        x = jnp.pad(x, pad)
        emb_time = jnp.pad(emb_time, pad)
        emb_label = jnp.pad(emb_label, pad)

    grid = (b_pad // tile_b,)

    # Scoped-VMEM budget: double-buffered activation tiles + resident weights
    # + matmul intermediates + headroom (capped for v7x's 64 MiB physical VMEM).
    itemsize = 4
    k_in = in_f + t_f + l_f
    vmem_bytes = itemsize * (
        2 * tile_b * k_in              # streamed input tiles (double-buffered)
        + 2 * tile_b * out_pad         # streamed output tile (double-buffered)
        + 3 * tile_b * out_pad         # h / t / l intermediates
        + k_in * out_pad               # resident weights
        + 24 * out_pad                 # bias / gamma / beta tiles (sublane-padded)
    ) + (2 << 20)
    vmem_bytes = int(min(max(vmem_bytes, 4 << 20), 48 << 20))

    kernel = functools.partial(
        _residual_block_kernel, out_features=out_f, matmul_dtype=matmul_dtype)

    out = pl.pallas_call(
        kernel,
        out_shape=jax.ShapeDtypeStruct((b_pad, out_pad), x.dtype),
        grid=grid,
        in_specs=[
            pl.BlockSpec((tile_b, in_f), lambda i: (i, 0)),     # x (streamed)
            pl.BlockSpec((tile_b, t_f), lambda i: (i, 0)),      # emb_time (streamed)
            pl.BlockSpec((tile_b, l_f), lambda i: (i, 0)),      # emb_label (streamed)
            pl.BlockSpec((in_f, out_pad), lambda i: (0, 0)),    # w_fc (resident)
            pl.BlockSpec((t_f, out_pad), lambda i: (0, 0)),     # w_t (resident)
            pl.BlockSpec((l_f, out_pad), lambda i: (0, 0)),     # w_l (resident)
            pl.BlockSpec((3, out_pad), lambda i: (0, 0)),       # biases (resident)
            pl.BlockSpec((1, out_pad), lambda i: (0, 0)),       # gamma (resident)
            pl.BlockSpec((1, out_pad), lambda i: (0, 0)),       # beta (resident)
        ],
        out_specs=pl.BlockSpec((tile_b, out_pad), lambda i: (i, 0)),
        compiler_params=pltpu.CompilerParams(
            dimension_semantics=("parallel",),
            vmem_limit_bytes=vmem_bytes,
        ),
    )(x, emb_time, emb_label, w_fc, w_t, w_l, b_pack, gamma, beta)

    return out[:B, :out_f]


def _reference(x, emb_time, emb_label, params):
    """Pure-JAX reference matching the PyTorch module."""
    h = x @ params["w_fc"] + params["b_fc"]
    t = _silu(emb_time) @ params["w_t"] + params["b_t"]
    l = _silu(emb_label) @ params["w_l"] + params["b_l"]
    h = h * l + t
    mean = jnp.mean(h, axis=-1, keepdims=True)
    var = jnp.mean((h - mean) ** 2, axis=-1, keepdims=True)
    h = (h - mean) * jax.lax.rsqrt(var + _LN_EPS)
    h = h * params["gamma"] + params["beta"]
    return _silu(h)


if __name__ == "__main__":
    # Small shapes consistent with the module's forward.
    B = 16
    in_features = 32
    out_features = 64
    time_features = 16
    label_features = 16
    dtype = jnp.float32

    key = jax.random.PRNGKey(0)
    keys = jax.random.split(key, 9)

    x = jax.random.normal(keys[0], (B, in_features), dtype)
    emb_time = jax.random.normal(keys[1], (B, time_features), dtype)
    emb_label = jax.random.normal(keys[2], (B, label_features), dtype)

    # Deterministic synthetic parameters (weights stored as [in, out]).
    params = {
        "w_fc": 0.1 * jax.random.normal(keys[3], (in_features, out_features), dtype),
        "b_fc": 0.05 * jax.random.normal(keys[4], (out_features,), dtype),
        "w_t": 0.1 * jax.random.normal(keys[5], (time_features, out_features), dtype),
        "b_t": 0.05 * jax.random.normal(keys[6], (out_features,), dtype),
        "w_l": 0.1 * jax.random.normal(keys[7], (label_features, out_features), dtype),
        "b_l": 0.05 * jax.random.normal(keys[8], (out_features,), dtype),
        "gamma": jnp.ones((out_features,), dtype),
        "beta": jnp.zeros((out_features,), dtype),
    }

    # tile_b auto-clamps to the (8-aligned) batch; at real batch sizes use
    # the default tile_b=512 (and matmul_dtype=jnp.bfloat16 for the MXU path).
    out = residual_block(x, emb_time, emb_label, params)
    out = jax.block_until_ready(out)

    ref = _reference(x, emb_time, emb_label, params)
    assert out.shape == (B, out_features)
    assert jnp.allclose(out, ref, atol=2e-5, rtol=2e-5), "mismatch vs reference"

    print("KERNEL_OK")
</pallas_src>

<mosaic_0001>
module attributes {stable_mosaic.version = 11 : i64} {
  func.func @_residual_block_kernel(%arg0: i32, %arg1: memref<16x32xf32, #tpu.memory_space<vmem>>, %arg2: memref<16x16xf32, #tpu.memory_space<vmem>>, %arg3: memref<16x16xf32, #tpu.memory_space<vmem>>, %arg4: memref<32x128xf32, #tpu.memory_space<vmem>>, %arg5: memref<16x128xf32, #tpu.memory_space<vmem>>, %arg6: memref<16x128xf32, #tpu.memory_space<vmem>>, %arg7: memref<3x128xf32, #tpu.memory_space<vmem>>, %arg8: memref<1x128xf32, #tpu.memory_space<vmem>>, %arg9: memref<1x128xf32, #tpu.memory_space<vmem>>, %arg10: memref<16x128xf32, #tpu.memory_space<vmem>>) attributes {dimension_semantics = [#tpu.dimension_semantics<parallel>], iteration_bounds = array<i64: 1>, scalar_prefetch = 0 : i64, scratch_operands = 0 : i64, tpu.core_type = #tpu.core_type<tc>, window_params = [{transform_indices = @transform_0, window_bounds = array<i64: 16, 32>}, {transform_indices = @transform_1, window_bounds = array<i64: 16, 16>}, {transform_indices = @transform_2, window_bounds = array<i64: 16, 16>}, {pipeline_mode = #tpu.pipeline_mode<synchronous>, transform_indices = @transform_3, window_bounds = array<i64: 32, 128>}, {pipeline_mode = #tpu.pipeline_mode<synchronous>, transform_indices = @transform_4, window_bounds = array<i64: 16, 128>}, {pipeline_mode = #tpu.pipeline_mode<synchronous>, transform_indices = @transform_5, window_bounds = array<i64: 16, 128>}, {pipeline_mode = #tpu.pipeline_mode<synchronous>, transform_indices = @transform_6, window_bounds = array<i64: 3, 128>}, {pipeline_mode = #tpu.pipeline_mode<synchronous>, transform_indices = @transform_7, window_bounds = array<i64: 1, 128>}, {pipeline_mode = #tpu.pipeline_mode<synchronous>, transform_indices = @transform_8, window_bounds = array<i64: 1, 128>}, {transform_indices = @transform_9, window_bounds = array<i64: 16, 128>}]} {
    %c0 = arith.constant 0 : index
    %c0_0 = arith.constant 0 : index
    %0 = vector.load %arg1[%c0, %c0_0] : memref<16x32xf32, #tpu.memory_space<vmem>>, vector<16x32xf32>
    %c0_1 = arith.constant 0 : index
    %c0_2 = arith.constant 0 : index
    %1 = vector.load %arg2[%c0_1, %c0_2] : memref<16x16xf32, #tpu.memory_space<vmem>>, vector<16x16xf32>
    %2 = arith.negf %1 : vector<16x16xf32>
    %3 = math.exp %2 : vector<16x16xf32>
    %cst = arith.constant 1.000000e+00 : f32
    %4 = vector.broadcast %cst : f32 to vector<16x16xf32>
    %5 = arith.addf %4, %3 : vector<16x16xf32>
    %6 = arith.divf %4, %5 : vector<16x16xf32>
    %7 = arith.mulf %1, %6 : vector<16x16xf32>
    %c0_3 = arith.constant 0 : index
    %c0_4 = arith.constant 0 : index
    %8 = vector.load %arg3[%c0_3, %c0_4] : memref<16x16xf32, #tpu.memory_space<vmem>>, vector<16x16xf32>
    %9 = arith.negf %8 : vector<16x16xf32>
    %10 = math.exp %9 : vector<16x16xf32>
    %cst_5 = arith.constant 1.000000e+00 : f32
    %11 = vector.broadcast %cst_5 : f32 to vector<16x16xf32>
    %12 = arith.addf %11, %10 : vector<16x16xf32>
    %13 = arith.divf %11, %12 : vector<16x16xf32>
    %14 = arith.mulf %8, %13 : vector<16x16xf32>
    %c0_6 = arith.constant 0 : index
    %c0_7 = arith.constant 0 : index
    %15 = vector.load %arg7[%c0_6, %c0_7] : memref<3x128xf32, #tpu.memory_space<vmem>>, vector<3x128xf32>
    %c0_8 = arith.constant 0 : index
    %c0_9 = arith.constant 0 : index
    %16 = vector.load %arg4[%c0_8, %c0_9] : memref<32x128xf32, #tpu.memory_space<vmem>>, vector<32x128xf32>
    %cst_10 = arith.constant dense<0.000000e+00> : vector<16x128xf32>
    %17 = tpu.matmul %0, %16, %cst_10 {dimension_numbers = #tpu.dot_dimension_numbers<[1], [0], [0], [1], [0, 0, 1, 1], [], []>} : vector<16x32xf32>, vector<32x128xf32>, vector<16x128xf32> -> vector<16x128xf32>
    %18 = vector.extract_strided_slice %15 {offsets = [0, 0], sizes = [1, 128], strides = [1, 1]} : vector<3x128xf32> to vector<1x128xf32>
    %19 = vector.broadcast %18 : vector<1x128xf32> to vector<16x128xf32>
    %20 = arith.addf %17, %19 : vector<16x128xf32>
    %c0_11 = arith.constant 0 : index
    %c0_12 = arith.constant 0 : index
    %21 = vector.load %arg5[%c0_11, %c0_12] : memref<16x128xf32, #tpu.memory_space<vmem>>, vector<16x128xf32>
    %cst_13 = arith.constant dense<0.000000e+00> : vector<16x128xf32>
    %22 = tpu.matmul %7, %21, %cst_13 {dimension_numbers = #tpu.dot_dimension_numbers<[1], [0], [0], [1], [0, 0, 1, 1], [], []>} : vector<16x16xf32>, vector<16x128xf32>, vector<16x128xf32> -> vector<16x128xf32>
    %23 = vector.extract_strided_slice %15 {offsets = [1, 0], sizes = [1, 128], strides = [1, 1]} : vector<3x128xf32> to vector<1x128xf32>
    %24 = vector.broadcast %23 : vector<1x128xf32> to vector<16x128xf32>
    %25 = arith.addf %22, %24 : vector<16x128xf32>
    %c0_14 = arith.constant 0 : index
    %c0_15 = arith.constant 0 : index
    %26 = vector.load %arg6[%c0_14, %c0_15] : memref<16x128xf32, #tpu.memory_space<vmem>>, vector<16x128xf32>
    %cst_16 = arith.constant dense<0.000000e+00> : vector<16x128xf32>
    %27 = tpu.matmul %14, %26, %cst_16 {dimension_numbers = #tpu.dot_dimension_numbers<[1], [0], [0], [1], [0, 0, 1, 1], [], []>} : vector<16x16xf32>, vector<16x128xf32>, vector<16x128xf32> -> vector<16x128xf32>
    %28 = vector.extract_strided_slice %15 {offsets = [2, 0], sizes = [1, 128], strides = [1, 1]} : vector<3x128xf32> to vector<1x128xf32>
    %29 = vector.broadcast %28 : vector<1x128xf32> to vector<16x128xf32>
    %30 = arith.addf %27, %29 : vector<16x128xf32>
    %31 = arith.mulf %20, %30 : vector<16x128xf32>
    %32 = arith.addf %31, %25 : vector<16x128xf32>
    %cst_17 = arith.constant dense<0.000000e+00> : vector<16xf32>
    %33 = vector.multi_reduction <add>, %32, %cst_17 [1] : vector<16x128xf32> to vector<16xf32>
    %34 = vector.shape_cast %33 : vector<16xf32> to vector<16x1xf32>
    %cst_18 = arith.constant 1.562500e-02 : f32
    %35 = vector.broadcast %cst_18 : f32 to vector<16x1xf32>
    %36 = arith.mulf %34, %35 : vector<16x1xf32>
    %37 = tpu.iota {dimensions = array<i32: 1>} : vector<16x128xi32>
    %c64_i32 = arith.constant 64 : i32
    %38 = vector.broadcast %c64_i32 : i32 to vector<16x128xi32>
    %39 = arith.cmpi slt, %37, %38 : vector<16x128xi32>
    %40 = vector.broadcast %36 : vector<16x1xf32> to vector<16x128xf32>
    %41 = arith.subf %32, %40 : vector<16x128xf32>
    %cst_19 = arith.constant 0.000000e+00 : f32
    %42 = vector.broadcast %cst_19 : f32 to vector<16x128xf32>
    %43 = arith.select %39, %41, %42 : vector<16x128xi1>, vector<16x128xf32>
    %44 = arith.mulf %43, %43 : vector<16x128xf32>
    %cst_20 = arith.constant dense<0.000000e+00> : vector<16xf32>
    %45 = vector.multi_reduction <add>, %44, %cst_20 [1] : vector<16x128xf32> to vector<16xf32>
    %46 = vector.shape_cast %45 : vector<16xf32> to vector<16x1xf32>
    %cst_21 = arith.constant 1.562500e-02 : f32
    %47 = vector.broadcast %cst_21 : f32 to vector<16x1xf32>
    %48 = arith.mulf %46, %47 : vector<16x1xf32>
    %cst_22 = arith.constant 9.99999974E-6 : f32
    %49 = vector.broadcast %cst_22 : f32 to vector<16x1xf32>
    %50 = arith.addf %48, %49 : vector<16x1xf32>
    %51 = math.rsqrt %50 : vector<16x1xf32>
    %52 = vector.broadcast %51 : vector<16x1xf32> to vector<16x128xf32>
    %53 = arith.mulf %43, %52 : vector<16x128xf32>
    %c0_23 = arith.constant 0 : index
    %c0_24 = arith.constant 0 : index
    %54 = vector.load %arg8[%c0_23, %c0_24] : memref<1x128xf32, #tpu.memory_space<vmem>>, vector<1x128xf32>
    %55 = vector.broadcast %54 : vector<1x128xf32> to vector<16x128xf32>
    %56 = arith.mulf %53, %55 : vector<16x128xf32>
    %c0_25 = arith.constant 0 : index
    %c0_26 = arith.constant 0 : index
    %57 = vector.load %arg9[%c0_25, %c0_26] : memref<1x128xf32, #tpu.memory_space<vmem>>, vector<1x128xf32>
    %58 = vector.broadcast %57 : vector<1x128xf32> to vector<16x128xf32>
    %59 = arith.addf %56, %58 : vector<16x128xf32>
    %60 = arith.negf %59 : vector<16x128xf32>
    %61 = math.exp %60 : vector<16x128xf32>
    %cst_27 = arith.constant 1.000000e+00 : f32
    %62 = vector.broadcast %cst_27 : f32 to vector<16x128xf32>
    %63 = arith.addf %62, %61 : vector<16x128xf32>
    %64 = arith.divf %62, %63 : vector<16x128xf32>
    %65 = arith.mulf %59, %64 : vector<16x128xf32>
    %c0_28 = arith.constant 0 : index
    %c0_29 = arith.constant 0 : index
    %66 = vector.load %arg10[%c0_28, %c0_29] : memref<16x128xf32, #tpu.memory_space<vmem>>, vector<16x128xf32>
    tpu.vector_store %arg10[%c0_28, %c0_29], %65 {strides = array<i32>} : memref<16x128xf32, #tpu.memory_space<vmem>>, vector<16x128xf32>,
    return
  }
  func.func @transform_0(%arg0: i32) -> (i32, i32) {
    %c0_i32 = arith.constant 0 : i32
    %c0_i32_0 = arith.constant 0 : i32
    return %arg0, %c0_i32 : i32, i32
  }
  func.func @transform_1(%arg0: i32) -> (i32, i32) {
    %c0_i32 = arith.constant 0 : i32
    %c0_i32_0 = arith.constant 0 : i32
    return %arg0, %c0_i32 : i32, i32
  }
  func.func @transform_2(%arg0: i32) -> (i32, i32) {
    %c0_i32 = arith.constant 0 : i32
    %c0_i32_0 = arith.constant 0 : i32
    return %arg0, %c0_i32 : i32, i32
  }
  func.func @transform_3(%arg0: i32) -> (i32, i32) {
    %c0_i32 = arith.constant 0 : i32
    %c0_i32_0 = arith.constant 0 : i32
    %c0_i32_1 = arith.constant 0 : i32
    return %c0_i32, %c0_i32_0 : i32, i32
  }
  func.func @transform_4(%arg0: i32) -> (i32, i32) {
    %c0_i32 = arith.constant 0 : i32
    %c0_i32_0 = arith.constant 0 : i32
    %c0_i32_1 = arith.constant 0 : i32
    return %c0_i32, %c0_i32_0 : i32, i32
  }
  func.func @transform_5(%arg0: i32) -> (i32, i32) {
    %c0_i32 = arith.constant 0 : i32
    %c0_i32_0 = arith.constant 0 : i32
    %c0_i32_1 = arith.constant 0 : i32
    return %c0_i32, %c0_i32_0 : i32, i32
  }
  func.func @transform_6(%arg0: i32) -> (i32, i32) {
    %c0_i32 = arith.constant 0 : i32
    %c0_i32_0 = arith.constant 0 : i32
    %c0_i32_1 = arith.constant 0 : i32
    return %c0_i32, %c0_i32_0 : i32, i32
  }
  func.func @transform_7(%arg0: i32) -> (i32, i32) {
    %c0_i32 = arith.constant 0 : i32
    %c0_i32_0 = arith.constant 0 : i32
    %c0_i32_1 = arith.constant 0 : i32
    return %c0_i32, %c0_i32_0 : i32, i32
  }
  func.func @transform_8(%arg0: i32) -> (i32, i32) {
    %c0_i32 = arith.constant 0 : i32
    %c0_i32_0 = arith.constant 0 : i32
    %c0_i32_1 = arith.constant 0 : i32
    return %c0_i32, %c0_i32_0 : i32, i32
  }
  func.func @transform_9(%arg0: i32) -> (i32, i32) {
    %c0_i32 = arith.constant 0 : i32
    %c0_i32_0 = arith.constant 0 : i32
    return %arg0, %c0_i32 : i32, i32
  }
}

</mosaic_0001>

<llo_original>
// kernel: tpu_custom_call.1
$region0: #{tpu_custom_call.1}
  #allocation0 [shape = 'u32[]', space=smem, size = 0x4, offset = 0x4, fixed_abs, tag = 'smem constant byte address 0x4 - core index']
  #allocation1 [shape = 'u32[72,128]{1,0:T(1,128)}', space=vmem, size = 0x9000, scoped, tag = 'internal scratch']
  %s0 = inlined_call_operand.hbm [shape: f32[16,32], index: 0, kind: input, shape index: {}]
  %s1 = inlined_call_operand.hbm [shape: f32[16,16], index: 1, kind: input, shape index: {}]
  %s2 = inlined_call_operand.hbm [shape: f32[16,16], index: 2, kind: input, shape index: {}]
  %s3 = inlined_call_operand.hbm [shape: f32[32,128], index: 3, kind: input, shape index: {}]
  %s4 = inlined_call_operand.hbm [shape: f32[16,128], index: 4, kind: input, shape index: {}]
  %s5 = inlined_call_operand.hbm [shape: f32[16,128], index: 5, kind: input, shape index: {}]
  %s6 = inlined_call_operand.vmem [shape: f32[3,128], index: 6, kind: input, shape index: {}]
  %s7 = inlined_call_operand.vmem [shape: f32[1,128], index: 7, kind: input, shape index: {}]
  %s8 = inlined_call_operand.vmem [shape: f32[1,128], index: 8, kind: input, shape index: {}]
  %s9 = inlined_call_operand.hbm [shape: f32[16,128], index: 9, kind: output, shape index: {}]
  %s10 = sld [smem:[#allocation0]]
  $region70: #{tpu_custom_call.1} parent=0
    _
  %s12 = ssub.s32 1, %s10
  %s13 = scalar_select 0, %s12, %s10
  $region1: #{tpu_custom_call.1} parent=0
    #allocation2 [shape = 'u8[8192]{0}', space=vmem, size = 0x2000, scoped, tag = 'input window, operand 0, single buffered']
    #allocation3 [shape = 's32[1]{0}', space=sflag, size = 0x4, scoped, tag = 'scoped memory for tpu_custom_call.1']
    #allocation4 [shape = 's32[1]{0}', space=sflag, size = 0x4, scoped, tag = 'scoped memory for tpu_custom_call.1']
    #allocation5 [shape = 'u8[8192]{0}', space=vmem, size = 0x2000, scoped, tag = 'input window, operand 1, single buffered']
    #allocation6 [shape = 's32[1]{0}', space=sflag, size = 0x4, scoped, tag = 'scoped memory for tpu_custom_call.1']
    #allocation7 [shape = 'u8[8192]{0}', space=vmem, size = 0x2000, scoped, tag = 'input window, operand 2, single buffered']
    #allocation8 [shape = 'u8[16384]{0}', space=vmem, size = 0x4000, scoped, tag = 'input window, operand 3, single buffered']
    #allocation9 [shape = 's32[1]{0}', space=sflag, size = 0x4, scoped, tag = 'scoped memory for tpu_custom_call.1']
    #allocation10 [shape = 'u8[8192]{0}', space=vmem, size = 0x2000, scoped, tag = 'input window, operand 4, single buffered']
    #allocation11 [shape = 'u8[8192]{0}', space=vmem, size = 0x2000, scoped, tag = 'input window, operand 5, single buffered']
    #allocation12 [shape = 's32[1]{0}', space=sflag, size = 0x4, scoped, tag = 'scoped memory for tpu_custom_call.1']
    #allocation13 [shape = 'u8[8192]{0}', space=vmem, size = 0x2000, scoped, tag = 'output window, operand 0, single buffered']
    %14 = vsyncpa [#allocation3], 0
    %15 = vsyncpa [#allocation6], 0
    %16 = vsyncpa [#allocation9], 0
    %17 = vsyncpa [#allocation12], 0
    %18 = vsyncpa [#allocation4], 0
    // Predicated region
    $region2: #{tpu_custom_call.1} parent=1 // pred_check
      _
    $region3: #{tpu_custom_call.1} parent=1 // pred_check_branch
      %20 = sbr.rel (0) target = $region5
    $region4: #{tpu_custom_call.1} parent=1 // pred_region
      %22 = vsyncadd [#allocation3], 0
      %s23 = sshll.u32 %s0, 4
      %s24 = int_to_ptr.hbm [resolvable:$true] %s23
      %s25 = sshll.u32 [#allocation2], 4
      %s26 = int_to_ptr.vmem [resolvable:$true] %s25
      %31 = dma.hbm_to_vmem [thread:$0]  %s24, 256, %s26, [#allocation3], 128, 128, 8
    $region5: #{tpu_custom_call.1} parent=1 // pred_fallthru
      _
    // Predicated region
    $region6: #{tpu_custom_call.1} parent=1 // pred_check
      _
    $region7: #{tpu_custom_call.1} parent=1 // pred_check_branch
      %33 = sbr.rel (0) target = $region9
    $region8: #{tpu_custom_call.1} parent=1 // pred_region
      %35 = vsyncadd [#allocation6], 0
      %s36 = sshll.u32 %s1, 4
      %s37 = int_to_ptr.hbm [resolvable:$true] %s36
      %s38 = sshll.u32 [#allocation5], 4
      %s39 = int_to_ptr.vmem [resolvable:$true] %s38
      %44 = dma.hbm_to_vmem [thread:$0]  %s37, 256, %s39, [#allocation6], 128, 128, 8
    $region9: #{tpu_custom_call.1} parent=1 // pred_fallthru
      _
    // Predicated region
    $region10: #{tpu_custom_call.1} parent=1 // pred_check
      _
    $region11: #{tpu_custom_call.1} parent=1 // pred_check_branch
      %46 = sbr.rel (0) target = $region13
    $region12: #{tpu_custom_call.1} parent=1 // pred_region
      %48 = vsyncadd [#allocation6], 0
      %s49 = sshll.u32 %s2, 4
      %s50 = int_to_ptr.hbm [resolvable:$true] %s49
      %s51 = sshll.u32 [#allocation7], 4
      %s52 = int_to_ptr.vmem [resolvable:$true] %s51
      %57 = dma.hbm_to_vmem [thread:$0]  %s50, 256, %s52, [#allocation6], 128, 128, 8
    $region13: #{tpu_custom_call.1} parent=1 // pred_fallthru
      _
    // Predicated region
    $region14: #{tpu_custom_call.1} parent=1 // pred_check
      _
    $region15: #{tpu_custom_call.1} parent=1 // pred_check_branch
      %59 = sbr.rel (0) target = $region17
    $region16: #{tpu_custom_call.1} parent=1 // pred_region
      %61 = vsyncadd [#allocation9], 0
      %s62 = sshll.u32 %s3, 4
      %s63 = int_to_ptr.hbm [resolvable:$true] %s62
      %s64 = sshll.u32 [#allocation8], 4
      %s65 = int_to_ptr.vmem [resolvable:$true] %s64
      %70 = dma.hbm_to_vmem [thread:$0]  %s63, 512, %s65, [#allocation9], 128, 128, 8
    $region17: #{tpu_custom_call.1} parent=1 // pred_fallthru
      _
    // Predicated region
    $region18: #{tpu_custom_call.1} parent=1 // pred_check
      _
    $region19: #{tpu_custom_call.1} parent=1 // pred_check_branch
      %72 = sbr.rel (0) target = $region21
    $region20: #{tpu_custom_call.1} parent=1 // pred_region
      %74 = vsyncadd [#allocation9], 0
      %s75 = sshll.u32 %s4, 4
      %s76 = int_to_ptr.hbm [resolvable:$true] %s75
      %s77 = sshll.u32 [#allocation10], 4
      %s78 = int_to_ptr.vmem [resolvable:$true] %s77
      %83 = dma.hbm_to_vmem [thread:$0]  %s76, 256, %s78, [#allocation9], 128, 128, 8
    $region21: #{tpu_custom_call.1} parent=1 // pred_fallthru
      _
    // Predicated region
    $region22: #{tpu_custom_call.1} parent=1 // pred_check
      _
    $region23: #{tpu_custom_call.1} parent=1 // pred_check_branch
      %85 = sbr.rel (0) target = $region25
    $region24: #{tpu_custom_call.1} parent=1 // pred_region
      %87 = vsyncadd [#allocation12], 0
      %s88 = sshll.u32 %s5, 4
      %s89 = int_to_ptr.hbm [resolvable:$true] %s88
      %s90 = sshll.u32 [#allocation11], 4
      %s91 = int_to_ptr.vmem [resolvable:$true] %s90
      %96 = dma.hbm_to_vmem [thread:$0]  %s89, 256, %s91, [#allocation12], 128, 128, 8
    $region25: #{tpu_custom_call.1} parent=1 // pred_fallthru
      _
    // Predicated region
    $region26: #{tpu_custom_call.1} parent=1 // pred_check
      _
    $region27: #{tpu_custom_call.1} parent=1 // pred_check_branch
      %98 = sbr.rel (0) target = $region29
    $region28: #{tpu_custom_call.1} parent=1 // pred_region
      _
    $region29: #{tpu_custom_call.1} parent=1 // pred_fallthru
      _
    // Predicated region
    $region30: #{tpu_custom_call.1} parent=1 // pred_check
      _
    $region31: #{tpu_custom_call.1} parent=1 // pred_check_branch
      %100 = sbr.rel (0) target = $region33
    $region32: #{tpu_custom_call.1} parent=1 // pred_region
      _
    $region33: #{tpu_custom_call.1} parent=1 // pred_fallthru
      _
    // Predicated region
    $region34: #{tpu_custom_call.1} parent=1 // pred_check
      _
    $region35: #{tpu_custom_call.1} parent=1 // pred_check_branch
      %102 = sbr.rel (0) target = $region37
    $region36: #{tpu_custom_call.1} parent=1 // pred_region
      _
    $region37: #{tpu_custom_call.1} parent=1 // pred_fallthru
      _
    // Predicated region
    $region38: #{tpu_custom_call.1} parent=1 // pred_check
      _
    $region39: #{tpu_custom_call.1} parent=1 // pred_check_branch
      %104 = sbr.rel (0) target = $region41
    $region40: #{tpu_custom_call.1} parent=1 // pred_region
      %106 = dma.done [#allocation3], 256
    $region41: #{tpu_custom_call.1} parent=1 // pred_fallthru
      _
    // Predicated region
    $region42: #{tpu_custom_call.1} parent=1 // pred_check
      _
    $region43: #{tpu_custom_call.1} parent=1 // pred_check_branch
      %108 = sbr.rel (0) target = $region45
    $region44: #{tpu_custom_call.1} parent=1 // pred_region
      %110 = dma.done [#allocation6], 256
    $region45: #{tpu_custom_call.1} parent=1 // pred_fallthru
      _
    // Predicated region
    $region46: #{tpu_custom_call.1} parent=1 // pred_check
      _
    $region47: #{tpu_custom_call.1} parent=1 // pred_check_branch
      %112 = sbr.rel (0) target = $region49
    $region48: #{tpu_custom_call.1} parent=1 // pred_region
      %114 = dma.done [#allocation6], 256
    $region49: #{tpu_custom_call.1} parent=1 // pred_fallthru
      _
    // Predicated region
    $region50: #{tpu_custom_call.1} parent=1 // pred_check
      _
    $region51: #{tpu_custom_call.1} parent=1 // pred_check_branch
      %116 = sbr.rel (0) target = $region53
    $region52: #{tpu_custom_call.1} parent=1 // pred_region
      %118 = dma.done [#allocation9], 512
    $region53: #{tpu_custom_call.1} parent=1 // pred_fallthru
      _
    // Predicated region
    $region54: #{tpu_custom_call.1} parent=1 // pred_check
      _
    $region55: #{tpu_custom_call.1} parent=1 // pred_check_branch
      %120 = sbr.rel (0) target = $region57
    $region56: #{tpu_custom_call.1} parent=1 // pred_region
      %122 = dma.done [#allocation9], 256
    $region57: #{tpu_custom_call.1} parent=1 // pred_fallthru
      _
    // Predicated region
    $region58: #{tpu_custom_call.1} parent=1 // pred_check
      _
    $region59: #{tpu_custom_call.1} parent=1 // pred_check_branch
      %124 = sbr.rel (0) target = $region61
    $region60: #{tpu_custom_call.1} parent=1 // pred_region
      %126 = dma.done [#allocation12], 256
    $region61: #{tpu_custom_call.1} parent=1 // pred_fallthru
      _
    %v127 = vld [vmem:[#allocation2] sm:$0xff]
    %v128 = vld [vmem:[#allocation2 + $0x8] sm:$0xff]
    %v129 = vld [vmem:[#allocation5] sm:$0xff]
    %v130 = vld [vmem:[#allocation5 + $0x8] sm:$0xff]
    %v131 = vxor.u32 %v129, 2147483648
    %v132 = vxor.u32 %v130, 2147483648
    %v133 = vmul.f32 %v131, 1.442695
    %v134 = vpow.pop %v133
    %v135 = vmul.f32 %v132, 1.442695
    %v136 = vpow.pop %v135
    %v137 = vadd.f32 %v134, 1.0
    %v138 = vadd.f32 %v136, 1.0
    %v139 = vrcp.pop %v137
    %v140 = vmul.f32 %v137, %v139
    %v141 = vsub.f32 1.0, %v140
    %v142 = vmul.f32 %v139, %v141
    %v143 = vadd.f32 %v139, %v142
    %vm144 = vweird.f32 %v137
    %vm145 = vweird.f32 %v139
    %vm146 = vmor %vm144, %vm145
    %v147 = vsel %vm146, %v139, %v143
    %v148 = vand.u32 2147483647, %v137
    %vm149 = vcmp.eq.f32.partialorder %v148, 8.507059e+37
    %v150 = vand.u32 %v137, 2147483648
    %v151 = vor.u32 1.1754944e-38, %v150
    %v152 = vsel %vm149, %v151, %v147
    %v153 = vmul.f32 1.0, %v152
    %v154 = vrcp.pop %v138
    %v155 = vmul.f32 %v138, %v154
    %v156 = vsub.f32 1.0, %v155
    %v157 = vmul.f32 %v154, %v156
    %v158 = vadd.f32 %v154, %v157
    %vm159 = vweird.f32 %v138
    %vm160 = vweird.f32 %v154
    %vm161 = vmor %vm159, %vm160
    %v162 = vsel %vm161, %v154, %v158
    %v163 = vand.u32 2147483647, %v138
    %vm164 = vcmp.eq.f32.partialorder %v163, 8.507059e+37
    %v165 = vand.u32 %v138, 2147483648
    %v166 = vor.u32 1.1754944e-38, %v165
    %v167 = vsel %vm164, %v166, %v162
    %v168 = vmul.f32 1.0, %v167
    %v169 = vmul.f32 %v129, %v153
    %v170 = vmul.f32 %v130, %v168
    %v171 = vld [vmem:[#allocation7] sm:$0xff]
    %v172 = vld [vmem:[#allocation7 + $0x8] sm:$0xff]
    %v173 = vxor.u32 %v171, 2147483648
    %v174 = vxor.u32 %v172, 2147483648
    %v175 = vmul.f32 %v173, 1.442695
    %v176 = vpow.pop %v175
    %v177 = vmul.f32 %v174, 1.442695
    %v178 = vpow.pop %v177
    %v179 = vadd.f32 %v176, 1.0
    %v180 = vadd.f32 %v178, 1.0
    %v181 = vrcp.pop %v179
    %v182 = vmul.f32 %v179, %v181
    %v183 = vsub.f32 1.0, %v182
    %v184 = vmul.f32 %v181, %v183
    %v185 = vadd.f32 %v181, %v184
    %vm186 = vweird.f32 %v179
    %vm187 = vweird.f32 %v181
    %vm188 = vmor %vm186, %vm187
    %v189 = vsel %vm188, %v181, %v185
    %v190 = vand.u32 2147483647, %v179
    %vm191 = vcmp.eq.f32.partialorder %v190, 8.507059e+37
    %v192 = vand.u32 %v179, 2147483648
    %v193 = vor.u32 1.1754944e-38, %v192
    %v194 = vsel %vm191, %v193, %v189
    %v195 = vmul.f32 1.0, %v194
    %v196 = vrcp.pop %v180
    %v197 = vmul.f32 %v180, %v196
    %v198 = vsub.f32 1.0, %v197
    %v199 = vmul.f32 %v196, %v198
    %v200 = vadd.f32 %v196, %v199
    %vm201 = vweird.f32 %v180
    %vm202 = vweird.f32 %v196
    %vm203 = vmor %vm201, %vm202
    %v204 = vsel %vm203, %v196, %v200
    %v205 = vand.u32 2147483647, %v180
    %vm206 = vcmp.eq.f32.partialorder %v205, 8.507059e+37
    %v207 = vand.u32 %v180, 2147483648
    %v208 = vor.u32 1.1754944e-38, %v207
    %v209 = vsel %vm206, %v208, %v204
    %v210 = vmul.f32 1.0, %v209
    %v211 = vmul.f32 %v171, %v195
    %v212 = vmul.f32 %v172, %v210
    %v213 = vld [vmem:[%s6] sm:$0x7]
    %v214 = vld [vmem:[#allocation8] sm:$0xff]
    %v215 = vld [vmem:[#allocation8 + $0x8] sm:$0xff]
    %v216 = vld [vmem:[#allocation8 + $0x10] sm:$0xff]
    %v217 = vld [vmem:[#allocation8 + $0x18] sm:$0xff]
    %v218 = vperm.slane %v213, 0
    %vm219 = vcmask 261120
    %v221 = vsel %vm219, %v127, 0
    %v224 = vsel %vm219, %v128, 0
    %226 = vmatpush.msra.mxu0 0.0
    %227 = vmatpush.msra.mxu0 0.0
    %228 = vmatpush.msra.mxu0 0.0
    %229 = vmatpush.msra.mxu0 0.0
    %230 = vmatpush.msra.mxu0 0.0
    %231 = vmatpush.msra.mxu0 0.0
    %232 = vmatpush.msra.mxu0 0.0
    %233 = vmatpush.msra.mxu0 0.0
    %234 = vmatpush.msra.mxu0 0.0
    %235 = vmatpush.msra.mxu0 0.0
    %236 = vmatpush.msra.mxu0 0.0
    %237 = vmatpush.msra.mxu0 0.0
    %238 = vmatpush.msra.mxu0 %v217
    %239 = vmatpush.msra.mxu0 %v216
    %240 = vmatpush.msra.mxu0 %v215
    %241 = vmatpush.msra.mxu0 %v214
    %242 = vmatmul.f32.gmra.mxu0 %v221
    %v243 = vpop.f32.mrf.mxu0
    %v244 = vadd.f32 %v218, %v243
    %245 = vmatmul.f32.gmra.mxu0 %v224
    %v246 = vpop.f32.mrf.mxu0
    %v247 = vadd.f32 %v218, %v246
    %248 = vdwg.mxu0
    %v249 = vld [vmem:[#allocation10] sm:$0xff]
    %v250 = vld [vmem:[#allocation10 + $0x8] sm:$0xff]
    %v251 = vperm.slane %v213, 1
    %vm252 = vcmask 130048
    %v254 = vsel %vm252, %v169, 0
    %v257 = vsel %vm252, %v170, 0
    %259 = vmatpush.msra.mxu0 0.0
    %260 = vmatpush.msra.mxu0 0.0
    %261 = vmatpush.msra.mxu0 0.0
    %262 = vmatpush.msra.mxu0 0.0
    %263 = vmatpush.msra.mxu0 0.0
    %264 = vmatpush.msra.mxu0 0.0
    %265 = vmatpush.msra.mxu0 0.0
    %266 = vmatpush.msra.mxu0 0.0
    %267 = vmatpush.msra.mxu0 0.0
    %268 = vmatpush.msra.mxu0 0.0
    %269 = vmatpush.msra.mxu0 0.0
    %270 = vmatpush.msra.mxu0 0.0
    %271 = vmatpush.msra.mxu0 0.0
    %272 = vmatpush.msra.mxu0 0.0
    %273 = vmatpush.msra.mxu0 %v250
    %274 = vmatpush.msra.mxu0 %v249
    %275 = vmatmul.f32.gmra.mxu0 %v254
    %v276 = vpop.f32.mrf.mxu0
    %v277 = vadd.f32 %v251, %v276
    %278 = vmatmul.f32.gmra.mxu0 %v257
    %v279 = vpop.f32.mrf.mxu0
    %v280 = vadd.f32 %v251, %v279
    %281 = vdwg.mxu0
    %v282 = vld [vmem:[#allocation11] sm:$0xff]
    %v283 = vld [vmem:[#allocation11 + $0x8] sm:$0xff]
    %v284 = vperm.slane %v213, 2
    %v286 = vsel %vm252, %v211, 0
    %v289 = vsel %vm252, %v212, 0
    %291 = vmatpush.msra.mxu0 0.0
    %292 = vmatpush.msra.mxu0 0.0
    %293 = vmatpush.msra.mxu0 0.0
    %294 = vmatpush.msra.mxu0 0.0
    %295 = vmatpush.msra.mxu0 0.0
    %296 = vmatpush.msra.mxu0 0.0
    %297 = vmatpush.msra.mxu0 0.0
    %298 = vmatpush.msra.mxu0 0.0
    %299 = vmatpush.msra.mxu0 0.0
    %300 = vmatpush.msra.mxu0 0.0
    %301 = vmatpush.msra.mxu0 0.0
    %302 = vmatpush.msra.mxu0 0.0
    %303 = vmatpush.msra.mxu0 0.0
    %304 = vmatpush.msra.mxu0 0.0
    %305 = vmatpush.msra.mxu0 %v283
    %306 = vmatpush.msra.mxu0 %v282
    %307 = vmatmul.f32.gmra.mxu0 %v286
    %v308 = vpop.f32.mrf.mxu0
    %v309 = vadd.f32 %v284, %v308
    %310 = vmatmul.f32.gmra.mxu0 %v289
    %v311 = vpop.f32.mrf.mxu0
    %v312 = vadd.f32 %v284, %v311
    %313 = vdwg.mxu0
    %v314 = vmul.f32 %v244, %v309
    %v315 = vmul.f32 %v247, %v312
    %v316 = vadd.f32 %v314, %v277
    %v317 = vadd.f32 %v315, %v280
    %318 = vadd.xlane.f32.xlu0 %v316
    %v319 = vpop.xlane.xlu0 %318
    %320 = vadd.xlane.f32.xlu0 %v317
    %v321 = vpop.xlane.xlu0 %320
    %v322 = vmul.f32 %v319, 0.015625
    %v323 = vmul.f32 %v321, 0.015625
    %v324 = vlaneseq
    %v325 = vand.u32 %v324, 127
    %vm326 = vcmp.lt.s32.totalorder %v325, 64
    %v327 = vsub.f32 %v316, %v322
    %v328 = vsub.f32 %v317, %v323
    %v329 = vsel %vm326, %v327, 0.0
    %v330 = vsel %vm326, %v328, 0.0
    %v331 = vmul.f32 %v329, %v329
    %v332 = vmul.f32 %v330, %v330
    %333 = vadd.xlane.f32.xlu0 %v331
    %v334 = vpop.xlane.xlu0 %333
    %335 = vadd.xlane.f32.xlu0 %v332
    %v336 = vpop.xlane.xlu0 %335
    %v337 = vmul.f32 %v334, 0.015625
    %v338 = vmul.f32 %v336, 0.015625
    %v339 = vadd.f32 %v337, 1e-05
    %v340 = vadd.f32 %v338, 1e-05
    %v341 = vrsqrt.pop %v339
    %v342 = vmul.f32 %v341, %v339
    %v343 = vmul.f32 %v342, %v341
    %v344 = vmul.f32 0.5, %v343
    %v345 = vsub.f32 1.5, %v344
    %v346 = vmul.f32 %v341, %v345
    %vm347 = vweird.f32 %v339
    %vm348 = vweird.f32 %v341
    %vm349 = vmor %vm347, %vm348
    %v350 = vsel %vm349, %v341, %v346
    %v351 = vrsqrt.pop %v340
    %v352 = vmul.f32 %v351, %v340
    %v353 = vmul.f32 %v352, %v351
    %v354 = vmul.f32 0.5, %v353
    %v355 = vsub.f32 1.5, %v354
    %v356 = vmul.f32 %v351, %v355
    %vm357 = vweird.f32 %v340
    %vm358 = vweird.f32 %v351
    %vm359 = vmor %vm357, %vm358
    %v360 = vsel %vm359, %v351, %v356
    %v361 = vmul.f32 %v329, %v350
    %v362 = vmul.f32 %v330, %v360
    %v363 = vld [vmem:[%s7] sm:$0x1]
    %v365 = vperm.slane %v363, 0
    %v367 = vmul.f32 %v361, %v365
    %v368 = vmul.f32 %v362, %v365
    %v369 = vld [vmem:[%s8] sm:$0x1]
    %v371 = vperm.slane %v369, 0
    %v373 = vadd.f32 %v367, %v371
    %v374 = vadd.f32 %v368, %v371
    %v375 = vxor.u32 %v373, 2147483648
    %v376 = vxor.u32 %v374, 2147483648
    %v377 = vmul.f32 %v375, 1.442695
    %v378 = vpow.pop %v377
    %v379 = vmul.f32 %v376, 1.442695
    %v380 = vpow.pop %v379
    %v381 = vadd.f32 %v378, 1.0
    %v382 = vadd.f32 %v380, 1.0
    %v383 = vrcp.pop %v381
    %v384 = vmul.f32 %v381, %v383
    %v385 = vsub.f32 1.0, %v384
    %v386 = vmul.f32 %v383, %v385
    %v387 = vadd.f32 %v383, %v386
    %vm388 = vweird.f32 %v381
    %vm389 = vweird.f32 %v383
    %vm390 = vmor %vm388, %vm389
    %v391 = vsel %vm390, %v383, %v387
    %v392 = vand.u32 2147483647, %v381
    %vm393 = vcmp.eq.f32.partialorder %v392, 8.507059e+37
    %v394 = vand.u32 %v381, 2147483648
    %v395 = vor.u32 1.1754944e-38, %v394
    %v396 = vsel %vm393, %v395, %v391
    %v397 = vmul.f32 1.0, %v396
    %v398 = vrcp.pop %v382
    %v399 = vmul.f32 %v382, %v398
    %v400 = vsub.f32 1.0, %v399
    %v401 = vmul.f32 %v398, %v400
    %v402 = vadd.f32 %v398, %v401
    %vm403 = vweird.f32 %v382
    %vm404 = vweird.f32 %v398
    %vm405 = vmor %vm403, %vm404
    %v406 = vsel %vm405, %v398, %v402
    %v407 = vand.u32 2147483647, %v382
    %vm408 = vcmp.eq.f32.partialorder %v407, 8.507059e+37
    %v409 = vand.u32 %v382, 2147483648
    %v410 = vor.u32 1.1754944e-38, %v409
    %v411 = vsel %vm408, %v410, %v406
    %v412 = vmul.f32 1.0, %v411
    %v413 = vmul.f32 %v373, %v397
    %v414 = vmul.f32 %v374, %v412
    %415 = vst [vmem:[#allocation13] sm:$0xff] %v413
    %416 = vst [vmem:[#allocation13 + $0x8] sm:$0xff] %v414
    // Predicated region
    $region62: #{tpu_custom_call.1} parent=1 // pred_check
      _
    $region63: #{tpu_custom_call.1} parent=1 // pred_check_branch
      %418 = sbr.rel (0) target = $region65
    $region64: #{tpu_custom_call.1} parent=1 // pred_region
      %420 = vsyncadd [#allocation4], 0
      %s421 = sshll.u32 [#allocation13], 4
      %s422 = int_to_ptr.vmem [resolvable:$true] %s421
      %s423 = sshll.u32 %s9, 4
      %s424 = int_to_ptr.hbm [resolvable:$true] %s423
      %429 = dma.vmem_to_hbm [thread:$0]  %s422, 256, %s424, [#allocation4], 128, 128, 8
    $region65: #{tpu_custom_call.1} parent=1 // pred_fallthru
      _
    // Predicated region
    $region66: #{tpu_custom_call.1} parent=1 // pred_check
      _
    $region67: #{tpu_custom_call.1} parent=1 // pred_check_branch
      %431 = sbr.rel (0) target = $region69
    $region68: #{tpu_custom_call.1} parent=1 // pred_region
      %433 = dma.done [#allocation4], 256
    $region69: #{tpu_custom_call.1} parent=1 // pred_fallthru
      _
    %434 = vsyncpa [#allocation3], 1
    %435 = vsyncpa [#allocation6], 1
    %436 = vsyncpa [#allocation9], 1
    %437 = vsyncpa [#allocation12], 1
    %438 = vsyncpa [#allocation4], 1

</llo_original>
